<compile_context>
chip_gen: v7x
topology: tpu7x:2x2x1
jax: 0.10.0
libtpu: 0.0.40
codegen_flags: <defaults>
</compile_context>

<pallas_src>
import functools
import operator
from functools import reduce
from typing import NamedTuple

import jax
import jax.numpy as jnp
from jax.experimental import pallas as pl
from jax.experimental.pallas import tpu as pltpu

_LANE = 128
_SUBLANE = 8
_M_PAD = 8                           # x is one row, padded to a full sublane group
_WEIGHT_BUDGET = 24 * 1024 * 1024    # bytes for the double-buffered weight tile
_MIN_TK = 512                        # prefer >=512-deep K tiles before splitting N
_VMEM_CAP = 48 * 1024 * 1024         # stay under v7x's 64 MiB physical VMEM


def _prod(iterable):
    return int(reduce(operator.mul, iterable, 1))


def _round_up(x, m):
    return ((x + m - 1) // m) * m


def _cdiv(a, b):
    return -(-a // b)


def _balanced_tile(dim_pad, tile_cap):
    """Split dim_pad into equal-ish lane-aligned tiles, each <= tile_cap.

    Returns (tile, num_tiles, padded_dim) with padded_dim = tile * num_tiles.
    """
    tile_cap = max(_LANE, (tile_cap // _LANE) * _LANE)
    n_tiles = _cdiv(dim_pad, tile_cap)
    tile = _round_up(_cdiv(dim_pad, n_tiles), _LANE)
    return tile, n_tiles, tile * n_tiles


def _select_tiles(in_features, out_features, itemsize, *,
                  weight_budget=_WEIGHT_BUDGET, min_n_blocks=1):
    """Pick lane-aligned (K_pad, N_pad, TK, TN) for a weight-stream byte budget."""
    k_pad = _round_up(in_features, _LANE)
    n_pad = _round_up(out_features, _LANE)
    per = 2 * itemsize                              # double-buffered weight tile

    single_n_ok = (min_n_blocks <= 1
                   and per * min(k_pad, _MIN_TK) * n_pad <= weight_budget)
    if single_n_ok:
        tn = n_pad                                  # contiguous weight rows in HBM
        tk_cap = weight_budget // (per * tn)
    else:
        tn_cap = max(_LANE, weight_budget // (per * min(k_pad, _MIN_TK)))
        if min_n_blocks > 1:                        # e.g. v7x: feed both TensorCores
            tn_cap = min(tn_cap,
                         max(_LANE, _round_up(_cdiv(n_pad, min_n_blocks), _LANE)))
        tn, _, n_pad = _balanced_tile(n_pad, tn_cap)
        tk_cap = weight_budget // (per * tn)
    tk, _, k_pad = _balanced_tile(k_pad, max(_LANE, min(k_pad, tk_cap)))
    return k_pad, n_pad, tk, tn


class LinearNdParams(NamedTuple):
    w_pad: jax.Array          # (K_pad, N_pad) compute_dtype, zero padded
    b_pad: jax.Array          # (1, N_pad)     float32, zero padded
    in_features: int
    out_features: int
    k_pad: int
    n_pad: int
    tk: int
    tn: int
    compute_dtype: jnp.dtype


def prepare_linear_nd(w, b, *, compute_dtype=None, min_n_blocks=1,
                      weight_budget=_WEIGHT_BUDGET):
    """One-time parameter prep: transpose + zero-pad + cast W and b.

    w: (out_features, in_features)  -- torch nn.Linear layout
    b: (out_features,)
    compute_dtype: dtype streamed through the MXU (e.g. jnp.bfloat16);
                   accumulation is always f32.
    min_n_blocks: set >=2 on v7x so the parallel N axis spans both TensorCores.
    """
    out_features, in_features = w.shape
    assert b.shape == (out_features,)
    if compute_dtype is None:
        compute_dtype = w.dtype
    compute_dtype = jnp.dtype(compute_dtype)
    itemsize = compute_dtype.itemsize

    k_pad, n_pad, tk, tn = _select_tiles(
        in_features, out_features, itemsize,
        weight_budget=weight_budget, min_n_blocks=min_n_blocks)

    # Padding is zeros -> the contraction result is unchanged.
    w_pad = jnp.zeros((k_pad, n_pad), compute_dtype)
    w_pad = w_pad.at[:in_features, :out_features].set(w.T.astype(compute_dtype))
    b_pad = jnp.zeros((1, n_pad), jnp.float32)
    b_pad = b_pad.at[0, :out_features].set(b.astype(jnp.float32))
    return LinearNdParams(w_pad, b_pad, in_features, out_features,
                          k_pad, n_pad, tk, tn, compute_dtype)


def _linear_nd_kernel(sum_ref, x_ref, w_ref, b_ref, o_ref, acc_ref, *,
                      tk, apply_sigmoid):
    """grid = (N_tiles, K_tiles); K is the trailing reduction axis."""
    k = pl.program_id(1)

    @pl.when(k == 0)
    def _():
        acc_ref[...] = jnp.zeros_like(acc_ref)

    # x is fully VMEM-resident; slice the current K chunk (offset 128-aligned).
    off = pl.multiple_of(k * tk, _LANE)
    acc_ref[...] += jnp.dot(x_ref[:, pl.ds(off, tk)], w_ref[...],
                            preferred_element_type=jnp.float32)

    @pl.when(k == pl.num_programs(1) - 1)
    def _():
        y = acc_ref[...] + b_ref[...].astype(jnp.float32)
        if apply_sigmoid:
            # sum_from + sigmoid(y); sum_from is a runtime SMEM scalar.
            y = sum_ref[0] + jax.nn.sigmoid(y)
        o_ref[...] = y.astype(o_ref.dtype)


def linear_nd(x, params: LinearNdParams, out_shape, sum_from=None):
    """Pallas forward pass of LinearNd.

    x: (in_features,) float
    params: from prepare_linear_nd (pad/cast done once, not per call)
    """
    p = params
    assert x.shape[-1] == p.in_features
    assert _prod(out_shape) == p.out_features

    apply_sigmoid = sum_from is not None
    # Runtime SMEM scalar; works with traced sum_from values (no host sync).
    sum_scalar = jnp.asarray(0.0 if sum_from is None else sum_from,
                             jnp.float32).reshape(1)

    # Only x (a few KiB) is padded per call; the weight was prepped at init.
    x_pad = jnp.zeros((_M_PAD, p.k_pad), p.compute_dtype)
    x_pad = x_pad.at[0, :p.in_features].set(x.astype(p.compute_dtype))

    grid = (p.n_pad // p.tn, p.k_pad // p.tk)
    kernel = functools.partial(_linear_nd_kernel, tk=p.tk,
                               apply_sigmoid=apply_sigmoid)

    itemsize = p.compute_dtype.itemsize
    cost = pl.CostEstimate(
        flops=2 * p.in_features * p.out_features,                 # real 1-row GEMV
        transcendentals=p.out_features if apply_sigmoid else 0,
        bytes_accessed=(p.k_pad * p.n_pad * itemsize              # weight stream
                        + _M_PAD * p.k_pad * itemsize             # x
                        + p.n_pad * 4                             # bias
                        + _M_PAD * p.n_pad * 4),                  # output
    )

    # VMEM footprint: double-buffered weight/out/bias tiles + resident x + acc.
    needed = (2 * p.tk * p.tn * itemsize
              + 2 * _M_PAD * p.k_pad * itemsize
              + 2 * _M_PAD * p.tn * 4
              + 2 * _SUBLANE * p.tn * 4
              + _M_PAD * p.tn * 4)
    vmem_limit = int(min(_VMEM_CAP, max(32 * 1024 * 1024, needed * 5 // 4)))

    y = pl.pallas_call(
        kernel,
        out_shape=jax.ShapeDtypeStruct((_M_PAD, p.n_pad), jnp.float32),
        grid_spec=pltpu.PrefetchScalarGridSpec(
            num_scalar_prefetch=1,                                # sum_from scalar
            grid=grid,
            in_specs=[
                # x: fully resident across the whole grid (sliced in-kernel).
                pl.BlockSpec((_M_PAD, p.k_pad), lambda j, k, s: (0, 0)),
                # streamed, double-buffered weight tile.
                pl.BlockSpec((p.tk, p.tn), lambda j, k, s: (k, j)),
                # bias tile for the current N slice.
                pl.BlockSpec((1, p.tn), lambda j, k, s: (0, j)),
            ],
            out_specs=pl.BlockSpec((_M_PAD, p.tn), lambda j, k, s: (0, j)),
            scratch_shapes=[pltpu.VMEM((_M_PAD, p.tn), jnp.float32)],
        ),
        compiler_params=pltpu.CompilerParams(
            dimension_semantics=("parallel", "arbitrary"),
            vmem_limit_bytes=vmem_limit,
        ),
        cost_estimate=cost,
    )(sum_scalar, x_pad, p.w_pad, p.b_pad)

    y = y[0, :p.out_features]
    if len(out_shape) > 1:
        return y.reshape(tuple(out_shape))
    return y.reshape(out_shape[0])


def init_params(key, in_features, out_features):
    # Deterministic init mimicking torch nn.Linear: U(-1/sqrt(K), 1/sqrt(K)).
    kw, kb = jax.random.split(key)
    bound = 1.0 / (in_features ** 0.5)
    w = jax.random.uniform(kw, (out_features, in_features), jnp.float32,
                           minval=-bound, maxval=bound)
    b = jax.random.uniform(kb, (out_features,), jnp.float32,
                           minval=-bound, maxval=bound)
    return w, b


if __name__ == "__main__":
    key = jax.random.PRNGKey(0)

    # ---- Case 1: module's small config, sigmoid branch, f32 path ----------
    in_features = 32
    out_shape = (4, 16)          # out_features = 64
    sum_from = 1

    kx, kp, key = jax.random.split(key, 3)
    x = jax.random.normal(kx, (in_features,), jnp.float32)
    w, b = init_params(kp, in_features, _prod(out_shape))

    params = prepare_linear_nd(w, b)                 # pad/cast once, not per call
    out = linear_nd(x, params, out_shape, sum_from=sum_from)
    out = jax.block_until_ready(out)

    ref = x @ w.T + b
    ref = jnp.float32(sum_from) + jax.nn.sigmoid(ref)
    ref = ref.reshape(out_shape)
    assert out.shape == tuple(out_shape)
    assert jnp.allclose(out, ref, atol=1e-5, rtol=1e-5)

    # ---- Case 2: awkward K (300 -> 384), no sigmoid, bf16 streaming --------
    in2 = 300
    out_shape2 = (6, 64)         # N = 384, single contiguous N tile
    kx2, kp2, key = jax.random.split(key, 3)
    x2 = jax.random.normal(kx2, (in2,), jnp.float32)
    w2, b2 = init_params(kp2, in2, _prod(out_shape2))

    params2 = prepare_linear_nd(w2, b2, compute_dtype=jnp.bfloat16)
    out2 = linear_nd(x2, params2, out_shape2, sum_from=None)
    out2 = jax.block_until_ready(out2)

    ref2 = (x2 @ w2.T + b2).reshape(out_shape2)
    assert out2.shape == tuple(out_shape2)
    assert jnp.allclose(out2, ref2, atol=5e-2, rtol=5e-2)   # bf16 stream tol

    # ---- Case 3: force a multi-K-tile grid (accumulate + finalize path) ----
    in3 = 1024
    out_shape3 = (8, 32)         # N = 256
    kx3, kp3 = jax.random.split(key)
    x3 = jax.random.normal(kx3, (in3,), jnp.float32)
    w3, b3 = init_params(kp3, in3, _prod(out_shape3))

    # Small budget -> TK = 512, 2 K-tiles; exercises the K reduction grid.
    params3 = prepare_linear_nd(w3, b3, weight_budget=2 * 512 * 256 * 4)
    assert params3.tk == 512 and params3.k_pad == 1024 and params3.tn == 256
    out3 = linear_nd(x3, params3, out_shape3, sum_from=2)
    out3 = jax.block_until_ready(out3)

    ref3 = jnp.float32(2) + jax.nn.sigmoid(x3 @ w3.T + b3)
    ref3 = ref3.reshape(out_shape3)
    assert out3.shape == tuple(out_shape3)
    assert jnp.allclose(out3, ref3, atol=1e-3, rtol=1e-3)

    print("KERNEL_OK")
</pallas_src>

<mosaic_0001>
module attributes {stable_mosaic.version = 11 : i64} {
  func.func @_linear_nd_kernel(%arg0: i32, %arg1: i32, %arg2: memref<1xf32, #tpu.memory_space<smem>>, %arg3: memref<8x128xf32, #tpu.memory_space<vmem>>, %arg4: memref<128x128xf32, #tpu.memory_space<vmem>>, %arg5: memref<1x128xf32, #tpu.memory_space<vmem>>, %arg6: memref<8x128xf32, #tpu.memory_space<vmem>>, %arg7: memref<8x128xf32, #tpu.memory_space<vmem>>) attributes {dimension_semantics = [#tpu.dimension_semantics<parallel>, #tpu.dimension_semantics<arbitrary>], iteration_bounds = array<i64: 1, 1>, scalar_prefetch = 1 : i64, scratch_operands = 1 : i64, tpu.core_type = #tpu.core_type<tc>, window_params = [{pipeline_mode = #tpu.pipeline_mode<synchronous>, transform_indices = @transform_0, window_bounds = array<i64: 8, 128>}, {transform_indices = @transform_1, window_bounds = array<i64: 128, 128>}, {transform_indices = @transform_2, window_bounds = array<i64: 1, 128>}, {transform_indices = @transform_3, window_bounds = array<i64: 8, 128>}]} {
    %c0_i32 = arith.constant 0 : i32
    %0 = arith.cmpi eq, %arg1, %c0_i32 : i32
    %1 = arith.extui %0 : i1 to i32
    %c0_i32_0 = arith.constant 0 : i32
    %2 = arith.cmpi ne, %1, %c0_i32_0 : i32
    scf.if %2 {
      %cst_9 = arith.constant 0.000000e+00 : f32
      %15 = vector.broadcast %cst_9 : f32 to vector<8x128xf32>
      %c0_10 = arith.constant 0 : index
      %c0_11 = arith.constant 0 : index
      %16 = vector.load %arg7[%c0_10, %c0_11] : memref<8x128xf32, #tpu.memory_space<vmem>>, vector<8x128xf32>
      tpu.vector_store %arg7[%c0_10, %c0_11], %15 {strides = array<i32>} : memref<8x128xf32, #tpu.memory_space<vmem>>, vector<8x128xf32>,
    } else {
    }
    %c128_i32 = arith.constant 128 : i32
    %3 = arith.muli %arg1, %c128_i32 : i32
    %4 = tpu.assume_multiple %3, 128 : i32
    %c0 = arith.constant 0 : index
    %c0_1 = arith.constant 0 : index
    %5 = vector.load %arg7[%c0, %c0_1] : memref<8x128xf32, #tpu.memory_space<vmem>>, vector<8x128xf32>
    %c0_2 = arith.constant 0 : index
    %6 = arith.index_cast %4 : i32 to index
    %7 = vector.load %arg3[%c0_2, %6] : memref<8x128xf32, #tpu.memory_space<vmem>>, vector<8x128xf32>
    %c0_3 = arith.constant 0 : index
    %c0_4 = arith.constant 0 : index
    %8 = vector.load %arg4[%c0_3, %c0_4] : memref<128x128xf32, #tpu.memory_space<vmem>>, vector<128x128xf32>
    %cst = arith.constant dense<0.000000e+00> : vector<8x128xf32>
    %9 = tpu.matmul %7, %8, %cst {dimension_numbers = #tpu.dot_dimension_numbers<[1], [0], [0], [1], [0, 0, 1, 1], [], []>} : vector<8x128xf32>, vector<128x128xf32>, vector<8x128xf32> -> vector<8x128xf32>
    %10 = arith.addf %5, %9 : vector<8x128xf32>
    %c0_5 = arith.constant 0 : index
    %c0_6 = arith.constant 0 : index
    %11 = vector.load %arg7[%c0_5, %c0_6] : memref<8x128xf32, #tpu.memory_space<vmem>>, vector<8x128xf32>
    tpu.vector_store %arg7[%c0_5, %c0_6], %10 {strides = array<i32>} : memref<8x128xf32, #tpu.memory_space<vmem>>, vector<8x128xf32>,
    %c0_i32_7 = arith.constant 0 : i32
    %12 = arith.cmpi eq, %arg1, %c0_i32_7 : i32
    %13 = arith.extui %12 : i1 to i32
    %c0_i32_8 = arith.constant 0 : i32
    %14 = arith.cmpi ne, %13, %c0_i32_8 : i32
    scf.if %14 {
      %c0_9 = arith.constant 0 : index
      %c0_10 = arith.constant 0 : index
      %15 = vector.load %arg7[%c0_9, %c0_10] : memref<8x128xf32, #tpu.memory_space<vmem>>, vector<8x128xf32>
      %c0_11 = arith.constant 0 : index
      %c0_12 = arith.constant 0 : index
      %16 = vector.load %arg5[%c0_11, %c0_12] : memref<1x128xf32, #tpu.memory_space<vmem>>, vector<1x128xf32>
      %17 = vector.broadcast %16 : vector<1x128xf32> to vector<8x128xf32>
      %18 = arith.addf %15, %17 : vector<8x128xf32>
      %c0_13 = arith.constant 0 : index
      %19 = memref.load %arg2[%c0_13] : memref<1xf32, #tpu.memory_space<smem>>
      %20 = arith.negf %18 : vector<8x128xf32>
      %21 = math.exp %20 : vector<8x128xf32>
      %cst_14 = arith.constant 1.000000e+00 : f32
      %22 = vector.broadcast %cst_14 : f32 to vector<8x128xf32>
      %23 = arith.addf %22, %21 : vector<8x128xf32>
      %24 = arith.divf %22, %23 : vector<8x128xf32>
      %25 = vector.broadcast %19 : f32 to vector<8x128xf32>
      %26 = arith.addf %25, %24 : vector<8x128xf32>
      %c0_15 = arith.constant 0 : index
      %c0_16 = arith.constant 0 : index
      %27 = vector.load %arg6[%c0_15, %c0_16] : memref<8x128xf32, #tpu.memory_space<vmem>>, vector<8x128xf32>
      tpu.vector_store %arg6[%c0_15, %c0_16], %26 {strides = array<i32>} : memref<8x128xf32, #tpu.memory_space<vmem>>, vector<8x128xf32>,
    } else {
    }
    return
  }
  func.func @transform_0(%arg0: i32, %arg1: i32, %arg2: memref<1xf32, #tpu.memory_space<smem>>) -> (i32, i32) {
    %c0_i32 = arith.constant 0 : i32
    %c0_i32_0 = arith.constant 0 : i32
    %c0_i32_1 = arith.constant 0 : i32
    return %c0_i32, %c0_i32_0 : i32, i32
  }
  func.func @transform_1(%arg0: i32, %arg1: i32, %arg2: memref<1xf32, #tpu.memory_space<smem>>) -> (i32, i32) {
    %c0_i32 = arith.constant 0 : i32
    return %arg1, %arg0 : i32, i32
  }
  func.func @transform_2(%arg0: i32, %arg1: i32, %arg2: memref<1xf32, #tpu.memory_space<smem>>) -> (i32, i32) {
    %c0_i32 = arith.constant 0 : i32
    %c0_i32_0 = arith.constant 0 : i32
    return %c0_i32, %arg0 : i32, i32
  }
  func.func @transform_3(%arg0: i32, %arg1: i32, %arg2: memref<1xf32, #tpu.memory_space<smem>>) -> (i32, i32) {
    %c0_i32 = arith.constant 0 : i32
    %c0_i32_0 = arith.constant 0 : i32
    return %c0_i32, %arg0 : i32, i32
  }
}

</mosaic_0001>

<llo_original>
// kernel: tpu_custom_call.1
$region0: #{tpu_custom_call.1}
  #allocation0 [shape = 'u32[]', space=smem, size = 0x4, offset = 0x4, fixed_abs, tag = 'smem constant byte address 0x4 - core index']
  #allocation1 [shape = 'u32[144,128]{1,0:T(1,128)}', space=vmem, size = 0x12000, scoped, tag = 'internal scratch']
  #allocation2 [shape = 'f32[8,128]{1,0:T(8,128)}', space=vmem, size = 0x1000, scoped, tag = 'scratch operand']
  #allocation3 [shape = 's32[1]{0}', space=sflag, size = 0x4, scoped, tag = 'scoped memory for tpu_custom_call.1']
  #allocation4 [shape = 'f32[1]{0:T(128)S(6)}', space=smem, size = 0x200, scoped, tag = 'prefetched SMEM operand 0']
  %s0 = inlined_call_operand.<no memory space> [shape: f32[1], index: 0, kind: input, shape index: {}]
  %s1 = inlined_call_operand.hbm [shape: f32[8,128], index: 1, kind: input, shape index: {}]
  %s2 = inlined_call_operand.hbm [shape: f32[128,128], index: 2, kind: input, shape index: {}]
  %s3 = inlined_call_operand.vmem [shape: f32[1,128], index: 3, kind: input, shape index: {}]
  %s4 = inlined_call_operand.hbm [shape: f32[8,128], index: 4, kind: output, shape index: {}]
  %s5 = sld [smem:[#allocation0]]
  $region38: #{tpu_custom_call.1} parent=0
    _
  %s7 = ssub.s32 1, %s5
  %s8 = scalar_select 0, %s7, %s5
  %9 = sst [smem:[#allocation4]] %s0
  $region1: #{tpu_custom_call.1} parent=0
    #allocation5 [shape = 'u8[4096]{0}', space=vmem, size = 0x1000, scoped, tag = 'input window, operand 1, single buffered']
    #allocation6 [shape = 's32[1]{0}', space=sflag, size = 0x4, scoped, tag = 'scoped memory for tpu_custom_call.1']
    #allocation7 [shape = 's32[1]{0}', space=sflag, size = 0x4, scoped, tag = 'scoped memory for tpu_custom_call.1']
    #allocation8 [shape = 'u8[65536]{0}', space=vmem, size = 0x10000, scoped, tag = 'input window, operand 2, single buffered']
    #allocation9 [shape = 's32[1]{0}', space=sflag, size = 0x4, scoped, tag = 'scoped memory for tpu_custom_call.1']
    #allocation10 [shape = 'u8[4096]{0}', space=vmem, size = 0x1000, scoped, tag = 'output window, operand 0, single buffered']
    %10 = vsyncpa [#allocation6], 0
    %11 = vsyncpa [#allocation9], 0
    %12 = vsyncpa [#allocation7], 0
    // Predicated region
    $region2: #{tpu_custom_call.1} parent=1 // pred_check
      _
    $region3: #{tpu_custom_call.1} parent=1 // pred_check_branch
      %14 = sbr.rel (0) target = $region5
    $region4: #{tpu_custom_call.1} parent=1 // pred_region
      %s16 = ssub.s32 128, 128
      %17 = vsyncadd [#allocation6], %s16
      %s19 = sshll.u32 [#allocation5], 4
      %s20 = int_to_ptr.vmem [resolvable:$true] %s19
      %22 = dma.hbm_to_vmem [thread:$0]  %s1, 128, %s20, [#allocation6]
    $region5: #{tpu_custom_call.1} parent=1 // pred_fallthru
      _
    // Predicated region
    $region6: #{tpu_custom_call.1} parent=1 // pred_check
      _
    $region7: #{tpu_custom_call.1} parent=1 // pred_check_branch
      %24 = sbr.rel (0) target = $region9
    $region8: #{tpu_custom_call.1} parent=1 // pred_region
      %s26 = ssub.s32 2048, 2048
      %27 = vsyncadd [#allocation9], %s26
      %s28 = sshll.u32 [#allocation8], 4
      %s29 = int_to_ptr.vmem [resolvable:$true] %s28
      %34 = dma.hbm_to_vmem [thread:$0]  %s2, 2048, %s29, [#allocation9], 128, 128, 8
    $region9: #{tpu_custom_call.1} parent=1 // pred_fallthru
      _
    // Predicated region
    $region10: #{tpu_custom_call.1} parent=1 // pred_check
      _
    $region11: #{tpu_custom_call.1} parent=1 // pred_check_branch
      %36 = sbr.rel (0) target = $region13
    $region12: #{tpu_custom_call.1} parent=1 // pred_region
      _
    $region13: #{tpu_custom_call.1} parent=1 // pred_fallthru
      _
    // Predicated region
    $region14: #{tpu_custom_call.1} parent=1 // pred_check
      _
    $region15: #{tpu_custom_call.1} parent=1 // pred_check_branch
      %38 = sbr.rel (0) target = $region17
    $region16: #{tpu_custom_call.1} parent=1 // pred_region
      %39 = dma.done [#allocation6], 128
    $region17: #{tpu_custom_call.1} parent=1 // pred_fallthru
      _
    // Predicated region
    $region18: #{tpu_custom_call.1} parent=1 // pred_check
      _
    $region19: #{tpu_custom_call.1} parent=1 // pred_check_branch
      %41 = sbr.rel (0) target = $region21
    $region20: #{tpu_custom_call.1} parent=1 // pred_region
      %42 = dma.done [#allocation9], 2048
    $region21: #{tpu_custom_call.1} parent=1 // pred_fallthru
      _
    %p43 = scmp.eq.s32.totalorder 0, 0
    // Predicated region
    $region22: #{tpu_custom_call.1} parent=1 // pred_check
      %p44 = pneg %p43
    $region23: #{tpu_custom_call.1} parent=1 // pred_check_branch
      %46 = sbr.rel (%p44) target = $region25
    $region24: #{tpu_custom_call.1} parent=1 // pred_region
      %47 = vst [vmem:[#allocation2] sm:$0xff] 0.0
    $region25: #{tpu_custom_call.1} parent=1 // pred_fallthru
      _
    %s48 = smul.u32 0, 128
    %v49 = vld [vmem:[#allocation2] sm:$0xff]
    %s50 = sshra.s32 %s48, 7
    %s51 = sand.u32 %s48, 127
    %s52 = scalar_lea.vmem [#allocation5], %s50
    %v53 = vld [vmem:[%s52] sm:$0xff]
    %v54 = vld [vmem:[#allocation8] sm:$0xff]
    %v55 = vld [vmem:[#allocation8 + $0x8] sm:$0xff]
    %v56 = vld [vmem:[#allocation8 + $0x10] sm:$0xff]
    %v57 = vld [vmem:[#allocation8 + $0x18] sm:$0xff]
    %v58 = vld [vmem:[#allocation8 + $0x20] sm:$0xff]
    %v59 = vld [vmem:[#allocation8 + $0x28] sm:$0xff]
    %v60 = vld [vmem:[#allocation8 + $0x30] sm:$0xff]
    %v61 = vld [vmem:[#allocation8 + $0x38] sm:$0xff]
    %v62 = vld [vmem:[#allocation8 + $0x40] sm:$0xff]
    %v63 = vld [vmem:[#allocation8 + $0x48] sm:$0xff]
    %v64 = vld [vmem:[#allocation8 + $0x50] sm:$0xff]
    %v65 = vld [vmem:[#allocation8 + $0x58] sm:$0xff]
    %v66 = vld [vmem:[#allocation8 + $0x60] sm:$0xff]
    %v67 = vld [vmem:[#allocation8 + $0x68] sm:$0xff]
    %v68 = vld [vmem:[#allocation8 + $0x70] sm:$0xff]
    %v69 = vld [vmem:[#allocation8 + $0x78] sm:$0xff]
    %70 = vmatprep.subr.mxu0 0.0
    %71 = vmatpush1.msra.mxu0 %v54
    %72 = vmatprep.subr.mxu0 0.0
    %73 = vmatpush1.msra.mxu0 %v55
    %74 = vmatprep.subr.mxu0 0.0
    %75 = vmatpush1.msra.mxu0 %v56
    %76 = vmatprep.subr.mxu0 0.0
    %77 = vmatpush1.msra.mxu0 %v57
    %78 = vmatprep.subr.mxu0 0.0
    %79 = vmatpush1.msra.mxu0 %v58
    %80 = vmatprep.subr.mxu0 0.0
    %81 = vmatpush1.msra.mxu0 %v59
    %82 = vmatprep.subr.mxu0 0.0
    %83 = vmatpush1.msra.mxu0 %v60
    %84 = vmatprep.subr.mxu0 0.0
    %85 = vmatpush1.msra.mxu0 %v61
    %86 = vmatprep.subr.mxu0 0.0
    %87 = vmatpush1.msra.mxu0 %v62
    %88 = vmatprep.subr.mxu0 0.0
    %89 = vmatpush1.msra.mxu0 %v63
    %90 = vmatprep.subr.mxu0 0.0
    %91 = vmatpush1.msra.mxu0 %v64
    %92 = vmatprep.subr.mxu0 0.0
    %93 = vmatpush1.msra.mxu0 %v65
    %94 = vmatprep.subr.mxu0 0.0
    %95 = vmatpush1.msra.mxu0 %v66
    %96 = vmatprep.subr.mxu0 0.0
    %97 = vmatpush1.msra.mxu0 %v67
    %98 = vmatprep.subr.mxu0 0.0
    %99 = vmatpush1.msra.mxu0 %v68
    %100 = vmatprep.subr.mxu0 0.0
    %101 = vmatpush1.msra.mxu0 %v69
    %102 = vmatprep.subr.mxu0 0.0
    %103 = vmatpush1.msra.mxu0 0.0
    %104 = vmatprep.subr.mxu0 0.0
    %105 = vmatpush1.msra.mxu0 0.0
    %106 = vmatprep.subr.mxu0 0.0
    %107 = vmatpush1.msra.mxu0 0.0
    %108 = vmatprep.subr.mxu0 0.0
    %109 = vmatpush1.msra.mxu0 0.0
    %110 = vmatprep.subr.mxu0 0.0
    %111 = vmatpush1.msra.mxu0 0.0
    %112 = vmatprep.subr.mxu0 0.0
    %113 = vmatpush1.msra.mxu0 0.0
    %114 = vmatprep.subr.mxu0 0.0
    %115 = vmatpush1.msra.mxu0 0.0
    %116 = vmatprep.subr.mxu0 0.0
    %117 = vmatpush1.msra.mxu0 0.0
    %118 = vmatprep.subr.mxu0 0.0
    %119 = vmatpush1.msra.mxu0 0.0
    %120 = vmatprep.subr.mxu0 0.0
    %121 = vmatpush1.msra.mxu0 0.0
    %122 = vmatprep.subr.mxu0 0.0
    %123 = vmatpush1.msra.mxu0 0.0
    %124 = vmatprep.subr.mxu0 0.0
    %125 = vmatpush1.msra.mxu0 0.0
    %126 = vmatprep.subr.mxu0 0.0
    %127 = vmatpush1.msra.mxu0 0.0
    %128 = vmatprep.subr.mxu0 0.0
    %129 = vmatpush1.msra.mxu0 0.0
    %130 = vmatprep.subr.mxu0 0.0
    %131 = vmatpush1.msra.mxu0 0.0
    %132 = vmatprep.subr.mxu0 0.0
    %133 = vmatpush1.msra.mxu0 0.0
    %134 = vmatprep.mubr.f32.mxu0 0.0
    %135 = vmatmul.mubr.f32.gmra.mrb[0].mxu0 %v53
    %v136 = vpop.f32.mrb[0].mxu0
    %v137 = vadd.f32 0.0, %v136
    %v138 = vpop.f32.mrb[0].mxu0
    %139 = vdwg.mxu0
    %v140 = vadd.f32 %v49, %v137
    %141 = vst [vmem:[#allocation2] sm:$0xff] %v140
    // Predicated region
    $region26: #{tpu_custom_call.1} parent=1 // pred_check
      %p142 = pneg %p43
    $region27: #{tpu_custom_call.1} parent=1 // pred_check_branch
      %144 = sbr.rel (%p142) target = $region29
    $region28: #{tpu_custom_call.1} parent=1 // pred_region
      %v145 = vld [vmem:[#allocation2] sm:$0xff]
      %v146 = vld [vmem:[%s3] sm:$0x1]
      %v148 = vlaneseq
      %v149 = vshrl.u32 %v148, 7
      %v150 = vsub.s32 0, %v149
      %v151 = vrot.slane %v146, %v150
      %v153 = vadd.f32 %v145, %v151
      %s154 = sld [smem:[#allocation4]]
      %v155 = vxor.u32 %v153, 2147483648
      %v156 = vmul.f32 %v155, 1.442695
      %v157 = vpow.pop %v156
      %v158 = vadd.f32 %v157, 1.0
      %v159 = vrcp.pop %v158
      %v160 = vmul.f32 1.0, %v159
      %v161 = vstv %s154
      %v162 = vadd.f32 %v161, %v160
      %163 = vst [vmem:[#allocation10] sm:$0xff] %v162
    $region29: #{tpu_custom_call.1} parent=1 // pred_fallthru
      _
    // Predicated region
    $region30: #{tpu_custom_call.1} parent=1 // pred_check
      _
    $region31: #{tpu_custom_call.1} parent=1 // pred_check_branch
      %165 = sbr.rel (0) target = $region33
    $region32: #{tpu_custom_call.1} parent=1 // pred_region
      %s167 = ssub.s32 128, 128
      %168 = vsyncadd [#allocation7], %s167
      %s170 = sshll.u32 [#allocation10], 4
      %s171 = int_to_ptr.vmem [resolvable:$true] %s170
      %173 = dma.vmem_to_hbm [thread:$0]  %s171, 128, %s4, [#allocation7]
    $region33: #{tpu_custom_call.1} parent=1 // pred_fallthru
      _
    // Predicated region
    $region34: #{tpu_custom_call.1} parent=1 // pred_check
      _
    $region35: #{tpu_custom_call.1} parent=1 // pred_check_branch
      %175 = sbr.rel (0) target = $region37
    $region36: #{tpu_custom_call.1} parent=1 // pred_region
      %176 = dma.done [#allocation7], 128
    $region37: #{tpu_custom_call.1} parent=1 // pred_fallthru
      _
    %177 = vsyncpa [#allocation6], 1
    %178 = vsyncpa [#allocation9], 1
    %179 = vsyncpa [#allocation7], 1

</llo_original>
